<compile_context>
chip_gen: v7x
topology: tpu7x:2x2x1
jax: 0.10.0
libtpu: 0.0.40
codegen_flags: <defaults>
</compile_context>

<pallas_src>
import functools

import jax
import jax.numpy as jnp
from jax.experimental import pallas as pl
from jax.experimental.pallas import tpu as pltpu

IN_DIM = 4
HID_DIM = 8
OUT_DIM = 2

# Packed-parameter slab offsets (flat f32 array, padded to 64 entries).
W1_OFF = 0                             # w1[i, j] at W1_OFF + i * HID_DIM + j
B1_OFF = W1_OFF + IN_DIM * HID_DIM     # 32
W2_OFF = B1_OFF + HID_DIM              # 40, w2[j, c] at W2_OFF + j * OUT_DIM + c
B2_OFF = W2_OFF + HID_DIM * OUT_DIM    # 56
PARAM_COUNT = B2_OFF + OUT_DIM         # 58
PARAM_PAD = 64                         # pad to a power of two (SMEM-friendly)


def actor_kernel(params_ref, x_ref, o_ref):
    """params_ref: f32[PARAM_PAD] in SMEM (resident across all grid steps).
    x_ref:       f32[IN_DIM, TB] in VMEM (batch on the 128-lane axis).
    o_ref:       f32[OUT_DIM, TB] in VMEM.
    """
    # One lane-dense [1, TB] row per input feature.
    x_rows = [x_ref[pl.ds(i, 1), :] for i in range(IN_DIM)]

    acc = [None] * OUT_DIM
    # Fully unrolled VPU FMAs: layer 1 (IN_DIM*HID_DIM) + ReLU + layer 2
    # (HID_DIM*OUT_DIM).  Weight scalars come from SMEM and are broadcast
    # across lanes; no MXU push/pop on the critical path.
    for j in range(HID_DIM):
        h = params_ref[B1_OFF + j] + params_ref[W1_OFF + 0 * HID_DIM + j] * x_rows[0]
        for i in range(1, IN_DIM):
            h = h + params_ref[W1_OFF + i * HID_DIM + j] * x_rows[i]
        h = jnp.maximum(h, 0.0)  # ReLU
        for c in range(OUT_DIM):
            term = params_ref[W2_OFF + j * OUT_DIM + c] * h
            acc[c] = term if acc[c] is None else acc[c] + term

    logit0 = acc[0] + params_ref[B2_OFF + 0]
    logit1 = acc[1] + params_ref[B2_OFF + 1]

    # Numerically-stable 2-class softmax, purely element-wise (the class axis
    # is unrolled, so there is no cross-lane reduction and only one divide).
    m = jnp.maximum(logit0, logit1)
    e0 = jnp.exp(logit0 - m)
    e1 = jnp.exp(logit1 - m)
    inv = 1.0 / (e0 + e1)
    o_ref[0:1, :] = e0 * inv
    o_ref[1:2, :] = e1 * inv


@functools.partial(jax.jit, static_argnames=("tb",))
def actor_forward(x, params, *, tb=128):
    """x: f32[B, IN_DIM] (PyTorch Linear convention) -> f32[B, OUT_DIM]."""
    B = x.shape[0]
    n_blocks = pl.cdiv(B, tb)
    Bp = n_blocks * tb
    # Feature-major, lane-dense batch; pad the batch to a tile multiple.
    xT = jnp.zeros((IN_DIM, Bp), x.dtype).at[:, :B].set(x.T)

    out_t = pl.pallas_call(
        actor_kernel,
        out_shape=jax.ShapeDtypeStruct((OUT_DIM, Bp), jnp.float32),
        grid=(n_blocks,),
        in_specs=[
            # One packed parameter slab, resident in SMEM for every grid step.
            pl.BlockSpec(memory_space=pltpu.MemorySpace.SMEM),
            pl.BlockSpec((IN_DIM, tb), lambda i: (0, i)),
        ],
        out_specs=pl.BlockSpec((OUT_DIM, tb), lambda i: (0, i)),
        compiler_params=pltpu.CompilerParams(
            dimension_semantics=("parallel",),  # shard batch across TCs on v7x
        ),
    )(params, xT)
    return out_t[:, :B].T


def init_params(key):
    """PyTorch default Linear init: U(-1/sqrt(fan_in), 1/sqrt(fan_in))."""
    k1, k2, k3, k4 = jax.random.split(key, 4)
    bound1 = 1.0 / jnp.sqrt(IN_DIM)
    bound2 = 1.0 / jnp.sqrt(HID_DIM)
    w1 = jax.random.uniform(k1, (IN_DIM, HID_DIM), jnp.float32, -bound1, bound1)
    b1 = jax.random.uniform(k2, (HID_DIM,), jnp.float32, -bound1, bound1)
    w2 = jax.random.uniform(k3, (HID_DIM, OUT_DIM), jnp.float32, -bound2, bound2)
    b2 = jax.random.uniform(k4, (OUT_DIM,), jnp.float32, -bound2, bound2)
    return w1, b1, w2, b2


def pack_params(w1, b1, w2, b2):
    flat = jnp.concatenate(
        [w1.reshape(-1), b1.reshape(-1), w2.reshape(-1), b2.reshape(-1)]
    ).astype(jnp.float32)
    return jnp.pad(flat, (0, PARAM_PAD - PARAM_COUNT))


def reference_forward(x, w1, b1, w2, b2):
    h = jnp.maximum(x @ w1 + b1, 0.0)
    logits = h @ w2 + b2
    return jax.nn.softmax(logits, axis=-1)


if __name__ == "__main__":
    key = jax.random.PRNGKey(0)
    k_params, k_x = jax.random.split(key)

    w1, b1, w2, b2 = init_params(k_params)
    params = pack_params(w1, b1, w2, b2)

    B = 256  # small CartPole-style batch; exercises a 2-step batch grid (tb=128)
    x = jax.random.normal(k_x, (B, IN_DIM), dtype=jnp.float32)

    probs = actor_forward(x, params, tb=128)
    probs = jax.block_until_ready(probs)

    ref = reference_forward(x, w1, b1, w2, b2)
    assert probs.shape == (B, OUT_DIM)
    assert jnp.allclose(probs, ref, atol=1e-5, rtol=1e-5)
    # each row is a probability distribution
    assert jnp.allclose(jnp.sum(probs, axis=-1), 1.0, atol=1e-5)

    print("KERNEL_OK")
</pallas_src>

<mosaic_0001>
module attributes {stable_mosaic.version = 11 : i64} {
  func.func @actor_kernel(%arg0: i32, %arg1: memref<64xf32, #tpu.memory_space<smem>>, %arg2: memref<4x128xf32, #tpu.memory_space<vmem>>, %arg3: memref<2x128xf32, #tpu.memory_space<vmem>>) attributes {dimension_semantics = [#tpu.dimension_semantics<parallel>], iteration_bounds = array<i64: 2>, scalar_prefetch = 0 : i64, scratch_operands = 0 : i64, tpu.core_type = #tpu.core_type<tc>, window_params = [{transform_indices = @transform_0, window_bounds = array<i64: 64>}, {transform_indices = @transform_1, window_bounds = array<i64: 4, 128>}, {transform_indices = @transform_2, window_bounds = array<i64: 2, 128>}]} {
    %c0 = arith.constant 0 : index
    %c0_0 = arith.constant 0 : index
    %0 = vector.load %arg2[%c0, %c0_0] : memref<4x128xf32, #tpu.memory_space<vmem>>, vector<1x128xf32>
    %c1 = arith.constant 1 : index
    %c0_1 = arith.constant 0 : index
    %1 = vector.load %arg2[%c1, %c0_1] : memref<4x128xf32, #tpu.memory_space<vmem>>, vector<1x128xf32>
    %c2 = arith.constant 2 : index
    %c0_2 = arith.constant 0 : index
    %2 = vector.load %arg2[%c2, %c0_2] : memref<4x128xf32, #tpu.memory_space<vmem>>, vector<1x128xf32>
    %c3 = arith.constant 3 : index
    %c0_3 = arith.constant 0 : index
    %3 = vector.load %arg2[%c3, %c0_3] : memref<4x128xf32, #tpu.memory_space<vmem>>, vector<1x128xf32>
    %c32 = arith.constant 32 : index
    %4 = memref.load %arg1[%c32] : memref<64xf32, #tpu.memory_space<smem>>
    %c0_4 = arith.constant 0 : index
    %5 = memref.load %arg1[%c0_4] : memref<64xf32, #tpu.memory_space<smem>>
    %6 = vector.broadcast %5 : f32 to vector<1x128xf32>
    %7 = arith.mulf %6, %0 : vector<1x128xf32>
    %8 = vector.broadcast %4 : f32 to vector<1x128xf32>
    %9 = arith.addf %8, %7 : vector<1x128xf32>
    %c8 = arith.constant 8 : index
    %10 = memref.load %arg1[%c8] : memref<64xf32, #tpu.memory_space<smem>>
    %11 = vector.broadcast %10 : f32 to vector<1x128xf32>
    %12 = arith.mulf %11, %1 : vector<1x128xf32>
    %13 = arith.addf %9, %12 : vector<1x128xf32>
    %c16 = arith.constant 16 : index
    %14 = memref.load %arg1[%c16] : memref<64xf32, #tpu.memory_space<smem>>
    %15 = vector.broadcast %14 : f32 to vector<1x128xf32>
    %16 = arith.mulf %15, %2 : vector<1x128xf32>
    %17 = arith.addf %13, %16 : vector<1x128xf32>
    %c24 = arith.constant 24 : index
    %18 = memref.load %arg1[%c24] : memref<64xf32, #tpu.memory_space<smem>>
    %19 = vector.broadcast %18 : f32 to vector<1x128xf32>
    %20 = arith.mulf %19, %3 : vector<1x128xf32>
    %21 = arith.addf %17, %20 : vector<1x128xf32>
    %cst = arith.constant 0.000000e+00 : f32
    %22 = vector.broadcast %cst : f32 to vector<1x128xf32>
    %23 = arith.maximumf %21, %22 : vector<1x128xf32>
    %c40 = arith.constant 40 : index
    %24 = memref.load %arg1[%c40] : memref<64xf32, #tpu.memory_space<smem>>
    %25 = vector.broadcast %24 : f32 to vector<1x128xf32>
    %26 = arith.mulf %25, %23 : vector<1x128xf32>
    %c41 = arith.constant 41 : index
    %27 = memref.load %arg1[%c41] : memref<64xf32, #tpu.memory_space<smem>>
    %28 = vector.broadcast %27 : f32 to vector<1x128xf32>
    %29 = arith.mulf %28, %23 : vector<1x128xf32>
    %c33 = arith.constant 33 : index
    %30 = memref.load %arg1[%c33] : memref<64xf32, #tpu.memory_space<smem>>
    %c1_5 = arith.constant 1 : index
    %31 = memref.load %arg1[%c1_5] : memref<64xf32, #tpu.memory_space<smem>>
    %32 = vector.broadcast %31 : f32 to vector<1x128xf32>
    %33 = arith.mulf %32, %0 : vector<1x128xf32>
    %34 = vector.broadcast %30 : f32 to vector<1x128xf32>
    %35 = arith.addf %34, %33 : vector<1x128xf32>
    %c9 = arith.constant 9 : index
    %36 = memref.load %arg1[%c9] : memref<64xf32, #tpu.memory_space<smem>>
    %37 = vector.broadcast %36 : f32 to vector<1x128xf32>
    %38 = arith.mulf %37, %1 : vector<1x128xf32>
    %39 = arith.addf %35, %38 : vector<1x128xf32>
    %c17 = arith.constant 17 : index
    %40 = memref.load %arg1[%c17] : memref<64xf32, #tpu.memory_space<smem>>
    %41 = vector.broadcast %40 : f32 to vector<1x128xf32>
    %42 = arith.mulf %41, %2 : vector<1x128xf32>
    %43 = arith.addf %39, %42 : vector<1x128xf32>
    %c25 = arith.constant 25 : index
    %44 = memref.load %arg1[%c25] : memref<64xf32, #tpu.memory_space<smem>>
    %45 = vector.broadcast %44 : f32 to vector<1x128xf32>
    %46 = arith.mulf %45, %3 : vector<1x128xf32>
    %47 = arith.addf %43, %46 : vector<1x128xf32>
    %cst_6 = arith.constant 0.000000e+00 : f32
    %48 = vector.broadcast %cst_6 : f32 to vector<1x128xf32>
    %49 = arith.maximumf %47, %48 : vector<1x128xf32>
    %c42 = arith.constant 42 : index
    %50 = memref.load %arg1[%c42] : memref<64xf32, #tpu.memory_space<smem>>
    %51 = vector.broadcast %50 : f32 to vector<1x128xf32>
    %52 = arith.mulf %51, %49 : vector<1x128xf32>
    %53 = arith.addf %26, %52 : vector<1x128xf32>
    %c43 = arith.constant 43 : index
    %54 = memref.load %arg1[%c43] : memref<64xf32, #tpu.memory_space<smem>>
    %55 = vector.broadcast %54 : f32 to vector<1x128xf32>
    %56 = arith.mulf %55, %49 : vector<1x128xf32>
    %57 = arith.addf %29, %56 : vector<1x128xf32>
    %c34 = arith.constant 34 : index
    %58 = memref.load %arg1[%c34] : memref<64xf32, #tpu.memory_space<smem>>
    %c2_7 = arith.constant 2 : index
    %59 = memref.load %arg1[%c2_7] : memref<64xf32, #tpu.memory_space<smem>>
    %60 = vector.broadcast %59 : f32 to vector<1x128xf32>
    %61 = arith.mulf %60, %0 : vector<1x128xf32>
    %62 = vector.broadcast %58 : f32 to vector<1x128xf32>
    %63 = arith.addf %62, %61 : vector<1x128xf32>
    %c10 = arith.constant 10 : index
    %64 = memref.load %arg1[%c10] : memref<64xf32, #tpu.memory_space<smem>>
    %65 = vector.broadcast %64 : f32 to vector<1x128xf32>
    %66 = arith.mulf %65, %1 : vector<1x128xf32>
    %67 = arith.addf %63, %66 : vector<1x128xf32>
    %c18 = arith.constant 18 : index
    %68 = memref.load %arg1[%c18] : memref<64xf32, #tpu.memory_space<smem>>
    %69 = vector.broadcast %68 : f32 to vector<1x128xf32>
    %70 = arith.mulf %69, %2 : vector<1x128xf32>
    %71 = arith.addf %67, %70 : vector<1x128xf32>
    %c26 = arith.constant 26 : index
    %72 = memref.load %arg1[%c26] : memref<64xf32, #tpu.memory_space<smem>>
    %73 = vector.broadcast %72 : f32 to vector<1x128xf32>
    %74 = arith.mulf %73, %3 : vector<1x128xf32>
    %75 = arith.addf %71, %74 : vector<1x128xf32>
    %cst_8 = arith.constant 0.000000e+00 : f32
    %76 = vector.broadcast %cst_8 : f32 to vector<1x128xf32>
    %77 = arith.maximumf %75, %76 : vector<1x128xf32>
    %c44 = arith.constant 44 : index
    %78 = memref.load %arg1[%c44] : memref<64xf32, #tpu.memory_space<smem>>
    %79 = vector.broadcast %78 : f32 to vector<1x128xf32>
    %80 = arith.mulf %79, %77 : vector<1x128xf32>
    %81 = arith.addf %53, %80 : vector<1x128xf32>
    %c45 = arith.constant 45 : index
    %82 = memref.load %arg1[%c45] : memref<64xf32, #tpu.memory_space<smem>>
    %83 = vector.broadcast %82 : f32 to vector<1x128xf32>
    %84 = arith.mulf %83, %77 : vector<1x128xf32>
    %85 = arith.addf %57, %84 : vector<1x128xf32>
    %c35 = arith.constant 35 : index
    %86 = memref.load %arg1[%c35] : memref<64xf32, #tpu.memory_space<smem>>
    %c3_9 = arith.constant 3 : index
    %87 = memref.load %arg1[%c3_9] : memref<64xf32, #tpu.memory_space<smem>>
    %88 = vector.broadcast %87 : f32 to vector<1x128xf32>
    %89 = arith.mulf %88, %0 : vector<1x128xf32>
    %90 = vector.broadcast %86 : f32 to vector<1x128xf32>
    %91 = arith.addf %90, %89 : vector<1x128xf32>
    %c11 = arith.constant 11 : index
    %92 = memref.load %arg1[%c11] : memref<64xf32, #tpu.memory_space<smem>>
    %93 = vector.broadcast %92 : f32 to vector<1x128xf32>
    %94 = arith.mulf %93, %1 : vector<1x128xf32>
    %95 = arith.addf %91, %94 : vector<1x128xf32>
    %c19 = arith.constant 19 : index
    %96 = memref.load %arg1[%c19] : memref<64xf32, #tpu.memory_space<smem>>
    %97 = vector.broadcast %96 : f32 to vector<1x128xf32>
    %98 = arith.mulf %97, %2 : vector<1x128xf32>
    %99 = arith.addf %95, %98 : vector<1x128xf32>
    %c27 = arith.constant 27 : index
    %100 = memref.load %arg1[%c27] : memref<64xf32, #tpu.memory_space<smem>>
    %101 = vector.broadcast %100 : f32 to vector<1x128xf32>
    %102 = arith.mulf %101, %3 : vector<1x128xf32>
    %103 = arith.addf %99, %102 : vector<1x128xf32>
    %cst_10 = arith.constant 0.000000e+00 : f32
    %104 = vector.broadcast %cst_10 : f32 to vector<1x128xf32>
    %105 = arith.maximumf %103, %104 : vector<1x128xf32>
    %c46 = arith.constant 46 : index
    %106 = memref.load %arg1[%c46] : memref<64xf32, #tpu.memory_space<smem>>
    %107 = vector.broadcast %106 : f32 to vector<1x128xf32>
    %108 = arith.mulf %107, %105 : vector<1x128xf32>
    %109 = arith.addf %81, %108 : vector<1x128xf32>
    %c47 = arith.constant 47 : index
    %110 = memref.load %arg1[%c47] : memref<64xf32, #tpu.memory_space<smem>>
    %111 = vector.broadcast %110 : f32 to vector<1x128xf32>
    %112 = arith.mulf %111, %105 : vector<1x128xf32>
    %113 = arith.addf %85, %112 : vector<1x128xf32>
    %c36 = arith.constant 36 : index
    %114 = memref.load %arg1[%c36] : memref<64xf32, #tpu.memory_space<smem>>
    %c4 = arith.constant 4 : index
    %115 = memref.load %arg1[%c4] : memref<64xf32, #tpu.memory_space<smem>>
    %116 = vector.broadcast %115 : f32 to vector<1x128xf32>
    %117 = arith.mulf %116, %0 : vector<1x128xf32>
    %118 = vector.broadcast %114 : f32 to vector<1x128xf32>
    %119 = arith.addf %118, %117 : vector<1x128xf32>
    %c12 = arith.constant 12 : index
    %120 = memref.load %arg1[%c12] : memref<64xf32, #tpu.memory_space<smem>>
    %121 = vector.broadcast %120 : f32 to vector<1x128xf32>
    %122 = arith.mulf %121, %1 : vector<1x128xf32>
    %123 = arith.addf %119, %122 : vector<1x128xf32>
    %c20 = arith.constant 20 : index
    %124 = memref.load %arg1[%c20] : memref<64xf32, #tpu.memory_space<smem>>
    %125 = vector.broadcast %124 : f32 to vector<1x128xf32>
    %126 = arith.mulf %125, %2 : vector<1x128xf32>
    %127 = arith.addf %123, %126 : vector<1x128xf32>
    %c28 = arith.constant 28 : index
    %128 = memref.load %arg1[%c28] : memref<64xf32, #tpu.memory_space<smem>>
    %129 = vector.broadcast %128 : f32 to vector<1x128xf32>
    %130 = arith.mulf %129, %3 : vector<1x128xf32>
    %131 = arith.addf %127, %130 : vector<1x128xf32>
    %cst_11 = arith.constant 0.000000e+00 : f32
    %132 = vector.broadcast %cst_11 : f32 to vector<1x128xf32>
    %133 = arith.maximumf %131, %132 : vector<1x128xf32>
    %c48 = arith.constant 48 : index
    %134 = memref.load %arg1[%c48] : memref<64xf32, #tpu.memory_space<smem>>
    %135 = vector.broadcast %134 : f32 to vector<1x128xf32>
    %136 = arith.mulf %135, %133 : vector<1x128xf32>
    %137 = arith.addf %109, %136 : vector<1x128xf32>
    %c49 = arith.constant 49 : index
    %138 = memref.load %arg1[%c49] : memref<64xf32, #tpu.memory_space<smem>>
    %139 = vector.broadcast %138 : f32 to vector<1x128xf32>
    %140 = arith.mulf %139, %133 : vector<1x128xf32>
    %141 = arith.addf %113, %140 : vector<1x128xf32>
    %c37 = arith.constant 37 : index
    %142 = memref.load %arg1[%c37] : memref<64xf32, #tpu.memory_space<smem>>
    %c5 = arith.constant 5 : index
    %143 = memref.load %arg1[%c5] : memref<64xf32, #tpu.memory_space<smem>>
    %144 = vector.broadcast %143 : f32 to vector<1x128xf32>
    %145 = arith.mulf %144, %0 : vector<1x128xf32>
    %146 = vector.broadcast %142 : f32 to vector<1x128xf32>
    %147 = arith.addf %146, %145 : vector<1x128xf32>
    %c13 = arith.constant 13 : index
    %148 = memref.load %arg1[%c13] : memref<64xf32, #tpu.memory_space<smem>>
    %149 = vector.broadcast %148 : f32 to vector<1x128xf32>
    %150 = arith.mulf %149, %1 : vector<1x128xf32>
    %151 = arith.addf %147, %150 : vector<1x128xf32>
    %c21 = arith.constant 21 : index
    %152 = memref.load %arg1[%c21] : memref<64xf32, #tpu.memory_space<smem>>
    %153 = vector.broadcast %152 : f32 to vector<1x128xf32>
    %154 = arith.mulf %153, %2 : vector<1x128xf32>
    %155 = arith.addf %151, %154 : vector<1x128xf32>
    %c29 = arith.constant 29 : index
    %156 = memref.load %arg1[%c29] : memref<64xf32, #tpu.memory_space<smem>>
    %157 = vector.broadcast %156 : f32 to vector<1x128xf32>
    %158 = arith.mulf %157, %3 : vector<1x128xf32>
    %159 = arith.addf %155, %158 : vector<1x128xf32>
    %cst_12 = arith.constant 0.000000e+00 : f32
    %160 = vector.broadcast %cst_12 : f32 to vector<1x128xf32>
    %161 = arith.maximumf %159, %160 : vector<1x128xf32>
    %c50 = arith.constant 50 : index
    %162 = memref.load %arg1[%c50] : memref<64xf32, #tpu.memory_space<smem>>
    %163 = vector.broadcast %162 : f32 to vector<1x128xf32>
    %164 = arith.mulf %163, %161 : vector<1x128xf32>
    %165 = arith.addf %137, %164 : vector<1x128xf32>
    %c51 = arith.constant 51 : index
    %166 = memref.load %arg1[%c51] : memref<64xf32, #tpu.memory_space<smem>>
    %167 = vector.broadcast %166 : f32 to vector<1x128xf32>
    %168 = arith.mulf %167, %161 : vector<1x128xf32>
    %169 = arith.addf %141, %168 : vector<1x128xf32>
    %c38 = arith.constant 38 : index
    %170 = memref.load %arg1[%c38] : memref<64xf32, #tpu.memory_space<smem>>
    %c6 = arith.constant 6 : index
    %171 = memref.load %arg1[%c6] : memref<64xf32, #tpu.memory_space<smem>>
    %172 = vector.broadcast %171 : f32 to vector<1x128xf32>
    %173 = arith.mulf %172, %0 : vector<1x128xf32>
    %174 = vector.broadcast %170 : f32 to vector<1x128xf32>
    %175 = arith.addf %174, %173 : vector<1x128xf32>
    %c14 = arith.constant 14 : index
    %176 = memref.load %arg1[%c14] : memref<64xf32, #tpu.memory_space<smem>>
    %177 = vector.broadcast %176 : f32 to vector<1x128xf32>
    %178 = arith.mulf %177, %1 : vector<1x128xf32>
    %179 = arith.addf %175, %178 : vector<1x128xf32>
    %c22 = arith.constant 22 : index
    %180 = memref.load %arg1[%c22] : memref<64xf32, #tpu.memory_space<smem>>
    %181 = vector.broadcast %180 : f32 to vector<1x128xf32>
    %182 = arith.mulf %181, %2 : vector<1x128xf32>
    %183 = arith.addf %179, %182 : vector<1x128xf32>
    %c30 = arith.constant 30 : index
    %184 = memref.load %arg1[%c30] : memref<64xf32, #tpu.memory_space<smem>>
    %185 = vector.broadcast %184 : f32 to vector<1x128xf32>
    %186 = arith.mulf %185, %3 : vector<1x128xf32>
    %187 = arith.addf %183, %186 : vector<1x128xf32>
    %cst_13 = arith.constant 0.000000e+00 : f32
    %188 = vector.broadcast %cst_13 : f32 to vector<1x128xf32>
    %189 = arith.maximumf %187, %188 : vector<1x128xf32>
    %c52 = arith.constant 52 : index
    %190 = memref.load %arg1[%c52] : memref<64xf32, #tpu.memory_space<smem>>
    %191 = vector.broadcast %190 : f32 to vector<1x128xf32>
    %192 = arith.mulf %191, %189 : vector<1x128xf32>
    %193 = arith.addf %165, %192 : vector<1x128xf32>
    %c53 = arith.constant 53 : index
    %194 = memref.load %arg1[%c53] : memref<64xf32, #tpu.memory_space<smem>>
    %195 = vector.broadcast %194 : f32 to vector<1x128xf32>
    %196 = arith.mulf %195, %189 : vector<1x128xf32>
    %197 = arith.addf %169, %196 : vector<1x128xf32>
    %c39 = arith.constant 39 : index
    %198 = memref.load %arg1[%c39] : memref<64xf32, #tpu.memory_space<smem>>
    %c7 = arith.constant 7 : index
    %199 = memref.load %arg1[%c7] : memref<64xf32, #tpu.memory_space<smem>>
    %200 = vector.broadcast %199 : f32 to vector<1x128xf32>
    %201 = arith.mulf %200, %0 : vector<1x128xf32>
    %202 = vector.broadcast %198 : f32 to vector<1x128xf32>
    %203 = arith.addf %202, %201 : vector<1x128xf32>
    %c15 = arith.constant 15 : index
    %204 = memref.load %arg1[%c15] : memref<64xf32, #tpu.memory_space<smem>>
    %205 = vector.broadcast %204 : f32 to vector<1x128xf32>
    %206 = arith.mulf %205, %1 : vector<1x128xf32>
    %207 = arith.addf %203, %206 : vector<1x128xf32>
    %c23 = arith.constant 23 : index
    %208 = memref.load %arg1[%c23] : memref<64xf32, #tpu.memory_space<smem>>
    %209 = vector.broadcast %208 : f32 to vector<1x128xf32>
    %210 = arith.mulf %209, %2 : vector<1x128xf32>
    %211 = arith.addf %207, %210 : vector<1x128xf32>
    %c31 = arith.constant 31 : index
    %212 = memref.load %arg1[%c31] : memref<64xf32, #tpu.memory_space<smem>>
    %213 = vector.broadcast %212 : f32 to vector<1x128xf32>
    %214 = arith.mulf %213, %3 : vector<1x128xf32>
    %215 = arith.addf %211, %214 : vector<1x128xf32>
    %cst_14 = arith.constant 0.000000e+00 : f32
    %216 = vector.broadcast %cst_14 : f32 to vector<1x128xf32>
    %217 = arith.maximumf %215, %216 : vector<1x128xf32>
    %c54 = arith.constant 54 : index
    %218 = memref.load %arg1[%c54] : memref<64xf32, #tpu.memory_space<smem>>
    %219 = vector.broadcast %218 : f32 to vector<1x128xf32>
    %220 = arith.mulf %219, %217 : vector<1x128xf32>
    %221 = arith.addf %193, %220 : vector<1x128xf32>
    %c55 = arith.constant 55 : index
    %222 = memref.load %arg1[%c55] : memref<64xf32, #tpu.memory_space<smem>>
    %223 = vector.broadcast %222 : f32 to vector<1x128xf32>
    %224 = arith.mulf %223, %217 : vector<1x128xf32>
    %225 = arith.addf %197, %224 : vector<1x128xf32>
    %c56 = arith.constant 56 : index
    %226 = memref.load %arg1[%c56] : memref<64xf32, #tpu.memory_space<smem>>
    %227 = vector.broadcast %226 : f32 to vector<1x128xf32>
    %228 = arith.addf %221, %227 : vector<1x128xf32>
    %c57 = arith.constant 57 : index
    %229 = memref.load %arg1[%c57] : memref<64xf32, #tpu.memory_space<smem>>
    %230 = vector.broadcast %229 : f32 to vector<1x128xf32>
    %231 = arith.addf %225, %230 : vector<1x128xf32>
    %232 = arith.maximumf %228, %231 : vector<1x128xf32>
    %233 = arith.subf %228, %232 : vector<1x128xf32>
    %234 = math.exp %233 : vector<1x128xf32>
    %235 = arith.subf %231, %232 : vector<1x128xf32>
    %236 = math.exp %235 : vector<1x128xf32>
    %237 = arith.addf %234, %236 : vector<1x128xf32>
    %cst_15 = arith.constant 1.000000e+00 : f32
    %238 = vector.broadcast %cst_15 : f32 to vector<1x128xf32>
    %239 = arith.divf %238, %237 : vector<1x128xf32>
    %240 = arith.mulf %234, %239 : vector<1x128xf32>
    %c0_16 = arith.constant 0 : index
    %c0_17 = arith.constant 0 : index
    %241 = vector.load %arg3[%c0_16, %c0_17] : memref<2x128xf32, #tpu.memory_space<vmem>>, vector<1x128xf32>
    tpu.vector_store %arg3[%c0_16, %c0_17], %240 {strides = array<i32>} : memref<2x128xf32, #tpu.memory_space<vmem>>, vector<1x128xf32>,
    %242 = arith.mulf %236, %239 : vector<1x128xf32>
    %c1_18 = arith.constant 1 : index
    %c0_19 = arith.constant 0 : index
    %243 = vector.load %arg3[%c1_18, %c0_19] : memref<2x128xf32, #tpu.memory_space<vmem>>, vector<1x128xf32>
    tpu.vector_store %arg3[%c1_18, %c0_19], %242 {strides = array<i32>} : memref<2x128xf32, #tpu.memory_space<vmem>>, vector<1x128xf32>,
    return
  }
  func.func @transform_0(%arg0: i32) -> i32 {
    %c0_i32 = arith.constant 0 : i32
    %c0_i32_0 = arith.constant 0 : i32
    return %c0_i32 : i32
  }
  func.func @transform_1(%arg0: i32) -> (i32, i32) {
    %c0_i32 = arith.constant 0 : i32
    %c0_i32_0 = arith.constant 0 : i32
    return %c0_i32, %arg0 : i32, i32
  }
  func.func @transform_2(%arg0: i32) -> (i32, i32) {
    %c0_i32 = arith.constant 0 : i32
    %c0_i32_0 = arith.constant 0 : i32
    return %c0_i32, %arg0 : i32, i32
  }
}

</mosaic_0001>

<llo_original>
// kernel: actor_forward.1
$region0: #{actor_forward.1}
  #allocation0 [shape = 'u32[]', space=smem, size = 0x4, offset = 0x4, fixed_abs, tag = 'smem constant byte address 0x4 - core index']
  #allocation1 [shape = 'u32[144,128]{1,0:T(1,128)}', space=vmem, size = 0x12000, scoped, tag = 'internal scratch']
  %s0 = inlined_call_operand.vmem [shape: f32[64], index: 0, kind: input, shape index: {}]
  %s1 = inlined_call_operand.hbm [shape: f32[4,256], index: 1, kind: input, shape index: {}]
  %s2 = inlined_call_operand.hbm [shape: f32[2,256], index: 2, kind: output, shape index: {}]
  %s3 = sld [smem:[#allocation0]]
  $region49: #{actor_forward.1} parent=0
    _
  %s5 = ssub.s32 1, %s3
  %s6 = scalar_select 0, %s5, %s3
  $region1: #{actor_forward.1} parent=0
    #allocation2 [shape = 'u8[512]{0}', space=smem, size = 0x200, scoped, tag = 'input window, operand 0, single buffered']
    #allocation3 [shape = 's32[2]{0}', space=sflag, size = 0x8, scoped, tag = 'scoped memory for actor_forward.1']
    #allocation4 [shape = 's32[2]{0}', space=sflag, size = 0x8, scoped, tag = 'scoped memory for actor_forward.1']
    #allocation5 [shape = 's32[2]{0}', space=sflag, size = 0x8, scoped, tag = 'scoped memory for actor_forward.1']
    #allocation6 [shape = 'u8[4096]{0}', space=vmem, size = 0x1000, scoped, tag = 'input window, operand 1']
    #allocation7 [shape = 'u8[2048]{0}', space=vmem, size = 0x800, scoped, tag = 'output window, operand 0']
    %7 = vsyncpa [#allocation5], 0
    %8 = vsyncpa [#allocation3], 0
    %s9 = scalar_lea.sflag [#allocation3], 1
    %10 = vsyncpa %s9, 0
    %11 = vsyncpa [#allocation4], 0
    %s12 = scalar_lea.sflag [#allocation4], 1
    %13 = vsyncpa %s12, 0
    loop: start=0, step=1, limit=4
    $region2: #{actor_forward.1} parent=1 // loop_pre_header
      _
    $region3: #{actor_forward.1} parent=1 // loop_header
      %s15 = sphi 0, %s19
      %p16 = scmp.ge.s32.totalorder %s15, 4
      %s23 = sphi 0, %s23
      %s25 = sphi 0, %s23
      %s26 = sphi 0, %s25
      %s40 = sphi 0, %s26
      %s46 = sphi 0, %s48
      %s49 = sphi 0, %s46
      %s50 = sphi 0, %s49
      %s66 = sphi 0, %s50
      %s72 = sphi 0, %s74
      %s75 = sphi 0, %s72
      %s76 = sphi 0, %s75
      %s92 = sphi 0, %s76
    $region4: #{actor_forward.1} parent=1 // loop_header_branch
      %18 = sbr.rel (%p16) target = $region8
    $region5: #{actor_forward.1} parent=1 // loop_body
      %s20 = ssub.s32 %s15, 1
      %s21 = ssub.s32 %s15, 2
      %s22 = sadd.s32 %s15, 1
      %s24 = sadd.s32 %s23, 1
      %p27 = scmp.eq.s32.totalorder %s15, 1
      %p28 = scmp.ne.s32.totalorder %s23, %s25
      %p29 = scmp.eq.s32.totalorder %s15, 0
      %p30 = por %p28, %p29
      %p31 = scmp.ne.s32.totalorder %s23, %s25
      %p32 = scmp.eq.s32.totalorder %s20, 1
      %p33 = por %p31, %p32
      %p34 = scmp.ne.s32.totalorder %s25, %s26
      %p35 = scmp.eq.s32.totalorder %s20, 0
      %p36 = por %p34, %p35
      %p37 = scmp.ne.s32.totalorder %s25, %s26
      %p38 = scmp.eq.s32.totalorder %s21, 1
      %p39 = por %p37, %p38
      %p41 = scmp.ne.s32.totalorder %s26, %s40
      %p42 = scmp.eq.s32.totalorder %s21, 0
      %p43 = por %p41, %p42
      %s44 = ssub.s32 %s15, %s22
      %p45 = scmp.eq.s32.totalorder %s44, 0
      %s47 = sadd.s32 %s46, 1
      %s48 = scalar_select %p45, %s46, %s47
      %p51 = pneg %p45
      %p52 = scmp.eq.s32.totalorder %s15, 1
      %p53 = por %p51, %p52
      %p54 = scmp.ne.s32.totalorder %s46, %s49
      %p55 = scmp.eq.s32.totalorder %s15, 0
      %p56 = por %p54, %p55
      %p57 = scmp.ne.s32.totalorder %s46, %s49
      %p58 = scmp.eq.s32.totalorder %s20, 1
      %p59 = por %p57, %p58
      %p60 = scmp.ne.s32.totalorder %s49, %s50
      %p61 = scmp.eq.s32.totalorder %s20, 0
      %p62 = por %p60, %p61
      %p63 = scmp.ne.s32.totalorder %s49, %s50
      %p64 = scmp.eq.s32.totalorder %s21, 1
      %p65 = por %p63, %p64
      %p67 = scmp.ne.s32.totalorder %s50, %s66
      %p68 = scmp.eq.s32.totalorder %s21, 0
      %p69 = por %p67, %p68
      %s70 = ssub.s32 %s15, %s22
      %p71 = scmp.eq.s32.totalorder %s70, 0
      %s73 = sadd.s32 %s72, 1
      %s74 = scalar_select %p71, %s72, %s73
      %p77 = pneg %p71
      %p78 = scmp.eq.s32.totalorder %s15, 1
      %p79 = por %p77, %p78
      %p80 = scmp.ne.s32.totalorder %s72, %s75
      %p81 = scmp.eq.s32.totalorder %s15, 0
      %p82 = por %p80, %p81
      %p83 = scmp.ne.s32.totalorder %s72, %s75
      %p84 = scmp.eq.s32.totalorder %s20, 1
      %p85 = por %p83, %p84
      %p86 = scmp.ne.s32.totalorder %s75, %s76
      %p87 = scmp.eq.s32.totalorder %s20, 0
      %p88 = por %p86, %p87
      %p89 = scmp.ne.s32.totalorder %s75, %s76
      %p90 = scmp.eq.s32.totalorder %s21, 1
      %p91 = por %p89, %p90
      %p93 = scmp.ne.s32.totalorder %s76, %s92
      %p94 = scmp.eq.s32.totalorder %s21, 0
      %p95 = por %p93, %p94
      %p96 = scmp.le.s32.totalorder 1, %s15
      %p97 = scmp.lt.s32.totalorder %s15, 3
      %p98 = pnand %p96, %p97
      %p99 = pneg %p98
      // Predicated region
      $region9: #{actor_forward.1} parent=5 // pred_check
        _
      $region10: #{actor_forward.1} parent=5 // pred_check_branch
        %101 = sbr.rel (%p98) target = $region12
      $region11: #{actor_forward.1} parent=5 // pred_region
        %s102 = ssub.s32 %s15, 1
        // Predicated region
        $region13: #{actor_forward.1} parent=11 // pred_check
          %p103 = pneg %p36
        $region14: #{actor_forward.1} parent=11 // pred_check_branch
          %105 = sbr.rel (%p103) target = $region16
        $region15: #{actor_forward.1} parent=11 // pred_region
          %s107 = ssub.s32 16, 16
          %108 = vsyncadd [#allocation5], %s107
          %s110 = sshll.u32 %s0, 4
          %s111 = int_to_ptr.vmem [resolvable:$true] %s110
          %113 = dma.vmem_to_smem %s111, 16, [#allocation2], [#allocation5]
        $region16: #{actor_forward.1} parent=11 // pred_fallthru
          _
      $region12: #{actor_forward.1} parent=5 // pred_fallthru
        _
      %p114 = scmp.lt.s32.totalorder %s15, 2
      // Predicated region
      $region17: #{actor_forward.1} parent=5 // pred_check
        %p115 = pneg %p114
      $region18: #{actor_forward.1} parent=5 // pred_check_branch
        %117 = sbr.rel (%p115) target = $region20
      $region19: #{actor_forward.1} parent=5 // pred_region
        // Predicated region
        $region21: #{actor_forward.1} parent=19 // pred_check
          %p118 = pneg %p56
        $region22: #{actor_forward.1} parent=19 // pred_check_branch
          %120 = sbr.rel (%p118) target = $region24
        $region23: #{actor_forward.1} parent=19 // pred_region
          %s121 = sand.u32 %s46, 1
          %s122 = scalar_lea.sflag [#allocation3], %s121
          %s123 = sand.u32 %s46, 1
          %s124 = smul.addr %s123, 4
          %s125 = scalar_lea.vmem [#allocation6], %s124
          %s127 = ssub.s32 64, 64
          %128 = vsyncadd %s122, %s127
          %s129 = smul.addr %s15, 64
          %s130 = scalar_lea.hbm %s1, %s129
          %s132 = sshll.u32 %s125, 4
          %s133 = int_to_ptr.vmem [resolvable:$true] %s132
          %135 = dma.hbm_to_vmem [thread:$0]  %s130, 64, %s133, %s122
        $region24: #{actor_forward.1} parent=19 // pred_fallthru
          _
      $region20: #{actor_forward.1} parent=5 // pred_fallthru
        _
      %p136 = scmp.le.s32.totalorder 1, %s15
      %p137 = scmp.lt.s32.totalorder %s15, 3
      %p138 = pnand %p136, %p137
      %p139 = pneg %p138
      // Predicated region
      $region25: #{actor_forward.1} parent=5 // pred_check
        _
      $region26: #{actor_forward.1} parent=5 // pred_check_branch
        %141 = sbr.rel (%p138) target = $region28
      $region27: #{actor_forward.1} parent=5 // pred_region
        %s142 = ssub.s32 %s15, 1
        // Predicated region
        $region29: #{actor_forward.1} parent=27 // pred_check
          %p143 = pneg %p36
        $region30: #{actor_forward.1} parent=27 // pred_check_branch
          %145 = sbr.rel (%p143) target = $region32
        $region31: #{actor_forward.1} parent=27 // pred_region
          %146 = dma.done [#allocation5], 16
        $region32: #{actor_forward.1} parent=27 // pred_fallthru
          _
        %s147 = sand.u32 %s49, 1
        %s148 = scalar_lea.sflag [#allocation3], %s147
        %s149 = sand.u32 %s49, 1
        %s150 = smul.addr %s149, 4
        %s151 = scalar_lea.vmem [#allocation6], %s150
        // Predicated region
        $region33: #{actor_forward.1} parent=27 // pred_check
          %p152 = pneg %p62
        $region34: #{actor_forward.1} parent=27 // pred_check_branch
          %154 = sbr.rel (%p152) target = $region36
        $region35: #{actor_forward.1} parent=27 // pred_region
          %155 = dma.done %s148, 64
        $region36: #{actor_forward.1} parent=27 // pred_fallthru
          _
        %156 = sfence
        %p157 = pneg %p36
        %p158 = pneg %p33
        %s159 = sand.u32 %s49, 1
        %s160 = scalar_lea.sflag [#allocation3], %s159
        %s161 = sand.u32 %s49, 1
        %s162 = smul.addr %s161, 4
        %s163 = scalar_lea.vmem [#allocation6], %s162
        %p164 = pneg %p62
        %p165 = pneg %p59
        %p166 = pneg %p88
        %p167 = pneg %p85
        %s168 = sand.u32 %s75, 1
        %s169 = scalar_lea.sflag [#allocation4], %s168
        %s170 = sand.u32 %s75, 1
        %s171 = smul.addr %s170, 2
        %s172 = scalar_lea.vmem [#allocation7], %s171
        %v173 = vld [vmem:[%s151] sm:$0x1]
        %v174 = vld [vmem:[%s151 + $0x1] sm:$0x1]
        %v175 = vld [vmem:[%s151 + $0x2] sm:$0x1]
        %v176 = vld [vmem:[%s151 + $0x3] sm:$0x1]
        %s177 = sld [smem:[#allocation2 + $0x20]]
        %s178 = sld [smem:[#allocation2]]
        %v179 = vstv %s178
        %v180 = vmul.f32 %v179, %v173
        %v181 = vstv %s177
        %v182 = vadd.f32 %v181, %v180
        %s183 = sld [smem:[#allocation2 + $0x8]]
        %v184 = vstv %s183
        %v185 = vmul.f32 %v184, %v174
        %v186 = vadd.f32 %v182, %v185
        %s187 = sld [smem:[#allocation2 + $0x10]]
        %v188 = vstv %s187
        %v189 = vmul.f32 %v188, %v175
        %v190 = vadd.f32 %v186, %v189
        %s191 = sld [smem:[#allocation2 + $0x18]]
        %v192 = vstv %s191
        %v193 = vmul.f32 %v192, %v176
        %v194 = vadd.f32 %v190, %v193
        %v195 = vmax.f32 %v194, 0.0
        %s196 = sld [smem:[#allocation2 + $0x28]]
        %v197 = vstv %s196
        %v198 = vmul.f32 %v197, %v195
        %s199 = sld [smem:[#allocation2 + $0x29]]
        %v200 = vstv %s199
        %v201 = vmul.f32 %v200, %v195
        %s202 = sld [smem:[#allocation2 + $0x21]]
        %s203 = sld [smem:[#allocation2 + $0x1]]
        %v204 = vstv %s203
        %v205 = vmul.f32 %v204, %v173
        %v206 = vstv %s202
        %v207 = vadd.f32 %v206, %v205
        %s208 = sld [smem:[#allocation2 + $0x9]]
        %v209 = vstv %s208
        %v210 = vmul.f32 %v209, %v174
        %v211 = vadd.f32 %v207, %v210
        %s212 = sld [smem:[#allocation2 + $0x11]]
        %v213 = vstv %s212
        %v214 = vmul.f32 %v213, %v175
        %v215 = vadd.f32 %v211, %v214
        %s216 = sld [smem:[#allocation2 + $0x19]]
        %v217 = vstv %s216
        %v218 = vmul.f32 %v217, %v176
        %v219 = vadd.f32 %v215, %v218
        %v220 = vmax.f32 %v219, 0.0
        %s221 = sld [smem:[#allocation2 + $0x2a]]
        %v222 = vstv %s221
        %v223 = vmul.f32 %v222, %v220
        %v224 = vadd.f32 %v198, %v223
        %s225 = sld [smem:[#allocation2 + $0x2b]]
        %v226 = vstv %s225
        %v227 = vmul.f32 %v226, %v220
        %v228 = vadd.f32 %v201, %v227
        %s229 = sld [smem:[#allocation2 + $0x22]]
        %s230 = sld [smem:[#allocation2 + $0x2]]
        %v231 = vstv %s230
        %v232 = vmul.f32 %v231, %v173
        %v233 = vstv %s229
        %v234 = vadd.f32 %v233, %v232
        %s235 = sld [smem:[#allocation2 + $0xa]]
        %v236 = vstv %s235
        %v237 = vmul.f32 %v236, %v174
        %v238 = vadd.f32 %v234, %v237
        %s239 = sld [smem:[#allocation2 + $0x12]]
        %v240 = vstv %s239
        %v241 = vmul.f32 %v240, %v175
        %v242 = vadd.f32 %v238, %v241
        %s243 = sld [smem:[#allocation2 + $0x1a]]
        %v244 = vstv %s243
        %v245 = vmul.f32 %v244, %v176
        %v246 = vadd.f32 %v242, %v245
        %v247 = vmax.f32 %v246, 0.0
        %s248 = sld [smem:[#allocation2 + $0x2c]]
        %v249 = vstv %s248
        %v250 = vmul.f32 %v249, %v247
        %v251 = vadd.f32 %v224, %v250
        %s252 = sld [smem:[#allocation2 + $0x2d]]
        %v253 = vstv %s252
        %v254 = vmul.f32 %v253, %v247
        %v255 = vadd.f32 %v228, %v254
        %s256 = sld [smem:[#allocation2 + $0x23]]
        %s257 = sld [smem:[#allocation2 + $0x3]]
        %v258 = vstv %s257
        %v259 = vmul.f32 %v258, %v173
        %v260 = vstv %s256
        %v261 = vadd.f32 %v260, %v259
        %s262 = sld [smem:[#allocation2 + $0xb]]
        %v263 = vstv %s262
        %v264 = vmul.f32 %v263, %v174
        %v265 = vadd.f32 %v261, %v264
        %s266 = sld [smem:[#allocation2 + $0x13]]
        %v267 = vstv %s266
        %v268 = vmul.f32 %v267, %v175
        %v269 = vadd.f32 %v265, %v268
        %s270 = sld [smem:[#allocation2 + $0x1b]]
        %v271 = vstv %s270
        %v272 = vmul.f32 %v271, %v176
        %v273 = vadd.f32 %v269, %v272
        %v274 = vmax.f32 %v273, 0.0
        %s275 = sld [smem:[#allocation2 + $0x2e]]
        %v276 = vstv %s275
        %v277 = vmul.f32 %v276, %v274
        %v278 = vadd.f32 %v251, %v277
        %s279 = sld [smem:[#allocation2 + $0x2f]]
        %v280 = vstv %s279
        %v281 = vmul.f32 %v280, %v274
        %v282 = vadd.f32 %v255, %v281
        %s283 = sld [smem:[#allocation2 + $0x24]]
        %s284 = sld [smem:[#allocation2 + $0x4]]
        %v285 = vstv %s284
        %v286 = vmul.f32 %v285, %v173
        %v287 = vstv %s283
        %v288 = vadd.f32 %v287, %v286
        %s289 = sld [smem:[#allocation2 + $0xc]]
        %v290 = vstv %s289
        %v291 = vmul.f32 %v290, %v174
        %v292 = vadd.f32 %v288, %v291
        %s293 = sld [smem:[#allocation2 + $0x14]]
        %v294 = vstv %s293
        %v295 = vmul.f32 %v294, %v175
        %v296 = vadd.f32 %v292, %v295
        %s297 = sld [smem:[#allocation2 + $0x1c]]
        %v298 = vstv %s297
        %v299 = vmul.f32 %v298, %v176
        %v300 = vadd.f32 %v296, %v299
        %v301 = vmax.f32 %v300, 0.0
        %s302 = sld [smem:[#allocation2 + $0x30]]
        %v303 = vstv %s302
        %v304 = vmul.f32 %v303, %v301
        %v305 = vadd.f32 %v278, %v304
        %s306 = sld [smem:[#allocation2 + $0x31]]
        %v307 = vstv %s306
        %v308 = vmul.f32 %v307, %v301
        %v309 = vadd.f32 %v282, %v308
        %s310 = sld [smem:[#allocation2 + $0x25]]
        %s311 = sld [smem:[#allocation2 + $0x5]]
        %v312 = vstv %s311
        %v313 = vmul.f32 %v312, %v173
        %v314 = vstv %s310
        %v315 = vadd.f32 %v314, %v313
        %s316 = sld [smem:[#allocation2 + $0xd]]
        %v317 = vstv %s316
        %v318 = vmul.f32 %v317, %v174
        %v319 = vadd.f32 %v315, %v318
        %s320 = sld [smem:[#allocation2 + $0x15]]
        %v321 = vstv %s320
        %v322 = vmul.f32 %v321, %v175
        %v323 = vadd.f32 %v319, %v322
        %s324 = sld [smem:[#allocation2 + $0x1d]]
        %v325 = vstv %s324
        %v326 = vmul.f32 %v325, %v176
        %v327 = vadd.f32 %v323, %v326
        %v328 = vmax.f32 %v327, 0.0
        %s329 = sld [smem:[#allocation2 + $0x32]]
        %v330 = vstv %s329
        %v331 = vmul.f32 %v330, %v328
        %v332 = vadd.f32 %v305, %v331
        %s333 = sld [smem:[#allocation2 + $0x33]]
        %v334 = vstv %s333
        %v335 = vmul.f32 %v334, %v328
        %v336 = vadd.f32 %v309, %v335
        %s337 = sld [smem:[#allocation2 + $0x26]]
        %s338 = sld [smem:[#allocation2 + $0x6]]
        %v339 = vstv %s338
        %v340 = vmul.f32 %v339, %v173
        %v341 = vstv %s337
        %v342 = vadd.f32 %v341, %v340
        %s343 = sld [smem:[#allocation2 + $0xe]]
        %v344 = vstv %s343
        %v345 = vmul.f32 %v344, %v174
        %v346 = vadd.f32 %v342, %v345
        %s347 = sld [smem:[#allocation2 + $0x16]]
        %v348 = vstv %s347
        %v349 = vmul.f32 %v348, %v175
        %v350 = vadd.f32 %v346, %v349
        %s351 = sld [smem:[#allocation2 + $0x1e]]
        %v352 = vstv %s351
        %v353 = vmul.f32 %v352, %v176
        %v354 = vadd.f32 %v350, %v353
        %v355 = vmax.f32 %v354, 0.0
        %s356 = sld [smem:[#allocation2 + $0x34]]
        %v357 = vstv %s356
        %v358 = vmul.f32 %v357, %v355
        %v359 = vadd.f32 %v332, %v358
        %s360 = sld [smem:[#allocation2 + $0x35]]
        %v361 = vstv %s360
        %v362 = vmul.f32 %v361, %v355
        %v363 = vadd.f32 %v336, %v362
        %s364 = sld [smem:[#allocation2 + $0x27]]
        %s365 = sld [smem:[#allocation2 + $0x7]]
        %v366 = vstv %s365
        %v367 = vmul.f32 %v366, %v173
        %v368 = vstv %s364
        %v369 = vadd.f32 %v368, %v367
        %s370 = sld [smem:[#allocation2 + $0xf]]
        %v371 = vstv %s370
        %v372 = vmul.f32 %v371, %v174
        %v373 = vadd.f32 %v369, %v372
        %s374 = sld [smem:[#allocation2 + $0x17]]
        %v375 = vstv %s374
        %v376 = vmul.f32 %v375, %v175
        %v377 = vadd.f32 %v373, %v376
        %s378 = sld [smem:[#allocation2 + $0x1f]]
        %v379 = vstv %s378
        %v380 = vmul.f32 %v379, %v176
        %v381 = vadd.f32 %v377, %v380
        %v382 = vmax.f32 %v381, 0.0
        %s383 = sld [smem:[#allocation2 + $0x36]]
        %v384 = vstv %s383
        %v385 = vmul.f32 %v384, %v382
        %v386 = vadd.f32 %v359, %v385
        %s387 = sld [smem:[#allocation2 + $0x37]]
        %v388 = vstv %s387
        %v389 = vmul.f32 %v388, %v382
        %v390 = vadd.f32 %v363, %v389
        %s391 = sld [smem:[#allocation2 + $0x38]]
        %v392 = vstv %s391
        %v393 = vadd.f32 %v386, %v392
        %s394 = sld [smem:[#allocation2 + $0x39]]
        %v395 = vstv %s394
        %v396 = vadd.f32 %v390, %v395
        %v397 = vmax.f32 %v393, %v396
        %v398 = vsub.f32 %v393, %v397
        %v399 = vmul.f32 %v398, 1.442695
        %v400 = vpow.pop %v399
        %v401 = vsub.f32 %v396, %v397
        %v402 = vmul.f32 %v401, 1.442695
        %v403 = vpow.pop %v402
        %v404 = vadd.f32 %v400, %v403
        %v405 = vrcp.pop %v404
        %v406 = vmul.f32 1.0, %v405
        %v407 = vmul.f32 %v400, %v406
        %408 = vst [vmem:[%s172] sm:$0x1] %v407
        %v409 = vmul.f32 %v403, %v406
        %410 = vst [vmem:[%s172 + $0x1] sm:$0x1] %v409
        %s411 = sand.u32 %s75, 1
        %s412 = scalar_lea.sflag [#allocation4], %s411
        %s413 = sand.u32 %s75, 1
        %s414 = smul.addr %s413, 2
        %s415 = scalar_lea.vmem [#allocation7], %s414
        // Predicated region
        $region37: #{actor_forward.1} parent=27 // pred_check
          %p416 = pneg %p85
        $region38: #{actor_forward.1} parent=27 // pred_check_branch
          %418 = sbr.rel (%p416) target = $region40
        $region39: #{actor_forward.1} parent=27 // pred_region
          %s420 = ssub.s32 32, 32
          %421 = vsyncadd %s412, %s420
          %s422 = smul.addr %s20, 32
          %s423 = scalar_lea.hbm %s2, %s422
          %s425 = sshll.u32 %s415, 4
          %s426 = int_to_ptr.vmem [resolvable:$true] %s425
          %428 = dma.vmem_to_hbm [thread:$0]  %s426, 32, %s423, %s412
        $region40: #{actor_forward.1} parent=27 // pred_fallthru
          _
      $region28: #{actor_forward.1} parent=5 // pred_fallthru
        _
      %p429 = scmp.le.s32.totalorder 2, %s15
      // Predicated region
      $region41: #{actor_forward.1} parent=5 // pred_check
        %p430 = pneg %p429
      $region42: #{actor_forward.1} parent=5 // pred_check_branch
        %432 = sbr.rel (%p430) target = $region44
      $region43: #{actor_forward.1} parent=5 // pred_region
        %s433 = ssub.s32 %s15, 2
        // Predicated region
        $region45: #{actor_forward.1} parent=43 // pred_check
          %p434 = pneg %p91
        $region46: #{actor_forward.1} parent=43 // pred_check_branch
          %436 = sbr.rel (%p434) target = $region48
        $region47: #{actor_forward.1} parent=43 // pred_region
          %s437 = sand.u32 %s76, 1
          %s438 = scalar_lea.sflag [#allocation4], %s437
          %s439 = sand.u32 %s76, 1
          %s440 = smul.addr %s439, 2
          %s441 = scalar_lea.vmem [#allocation7], %s440
          %442 = dma.done %s438, 32
        $region48: #{actor_forward.1} parent=43 // pred_fallthru
          _
      $region44: #{actor_forward.1} parent=5 // pred_fallthru
        _
    $region6: #{actor_forward.1} parent=1 // loop_footer
      %s19 = sadd.s32 1, %s15
    $region7: #{actor_forward.1} parent=1 // loop_footer_branch
      %14 = sbr.rel target = $region3
    $region8: #{actor_forward.1} parent=1 // loop_exit
      _
    %443 = vsyncpa [#allocation3], 1
    %s444 = scalar_lea.sflag [#allocation3], 1
    %445 = vsyncpa %s444, 1
    %446 = vsyncpa [#allocation4], 1
    %s447 = scalar_lea.sflag [#allocation4], 1
    %448 = vsyncpa %s447, 1
    %449 = vsyncpa [#allocation5], 1
    %s450 = scalar_lea.sflag [#allocation5], 1
    %451 = vsyncpa %s450, 1

</llo_original>
